<compile_context>
chip_gen: v5e
topology: v5e:2x2
jax: 0.10.0
libtpu: 0.0.40
codegen_flags: <defaults>
</compile_context>

<pallas_src>
import jax
import jax.numpy as jnp
from jax.experimental import pallas as pl
from jax.experimental.pallas import tpu as pltpu

SMALL_NUMBER = 1e-7


def _finetune_kernel(temp_ref, code_emb_ref, query_emb_ref, w_ref, b_ref,
                     q_out_ref, c_out_ref):
    """One batch tile: pool -> fused pooler dense+tanh -> L2 norm -> scale."""
    tb = q_out_ref.shape[0]                               # batch tile rows
    seq = code_emb_ref.shape[1]
    inv_seq = jnp.float32(1.0 / seq)                      # compile-time const
    scale = jnp.exp(temp_ref[0])                          # exp(temp), scalar (SMEM)

    # Sequence mean-pool (sublane/XLU reduce over axis 1), kept as sum * 1/S.
    pooled_q = jnp.sum(query_emb_ref[...], axis=1) * inv_seq   # (TB, H)
    pooled_c = jnp.sum(code_emb_ref[...], axis=1) * inv_seq    # (TB, H)

    # Fused pooler matmul: one taller LHS shared across both branches.
    stacked = jnp.concatenate([pooled_q, pooled_c], axis=0)    # (2*TB, H)
    h = jnp.tanh(
        jnp.dot(stacked, w_ref[...], preferred_element_type=jnp.float32)
        + b_ref[...]
    )                                                          # (2*TB, H)
    # NOTE: at H > 128 on v6e/v7x, cast `stacked`/`w` to bf16 here
    # (preferred_element_type stays f32) to fill the 256-wide MXU.

    # Row-wise L2 norm; fold exp(temp) into the per-row reciprocal (EUP slot).
    sumsq = jnp.sum(h * h, axis=-1, keepdims=True)             # (2*TB, 1)
    norm = jnp.sqrt(sumsq) + SMALL_NUMBER
    row_scale = pl.reciprocal(norm, approx=True) * scale       # (2*TB, 1)
    out = h * row_scale                                        # (2*TB, H)

    # Match PyTorch return order: (queries_scaled, code_scaled)
    q_out_ref[...] = out[:tb]
    c_out_ref[...] = out[tb:]


def code_search_forward(temp, code_emb, query_emb, pooler_w, pooler_b, *, tb=8):
    """temp: (1,) f32; code_emb/query_emb: (B,S,H) f32; pooler_w: (H,H); pooler_b: (1,H)."""
    B, S, H = code_emb.shape
    assert B % tb == 0, "batch must be divisible by the batch tile"

    out_shape = (
        jax.ShapeDtypeStruct((B, H), jnp.float32),  # queries
        jax.ShapeDtypeStruct((B, H), jnp.float32),  # code
    )

    flops = 2 * (2 * B) * H * H + 6 * B * S * H          # fused matmul + pool/norm
    bytes_accessed = (2 * B * S * H + 2 * B * H + H * H + H) * 4
    cost = pl.CostEstimate(flops=flops,
                           transcendentals=2 * B * H + 2 * B,
                           bytes_accessed=bytes_accessed)

    return pl.pallas_call(
        _finetune_kernel,
        out_shape=out_shape,
        grid=(B // tb,),
        in_specs=[
            # temp scalar lives in SMEM, whole-array (no blocking).
            pl.BlockSpec(memory_space=pltpu.MemorySpace.SMEM),
            # Batch-tiled embedding streams (double-buffered by Pallas).
            pl.BlockSpec((tb, S, H), lambda i: (i, 0, 0)),     # code_emb
            pl.BlockSpec((tb, S, H), lambda i: (i, 0, 0)),     # query_emb
            # Weights: same block every step -> stay resident in VMEM.
            pl.BlockSpec((H, H), lambda i: (0, 0)),            # pooler_w
            pl.BlockSpec((1, H), lambda i: (0, 0)),            # pooler_b
        ],
        out_specs=(
            pl.BlockSpec((tb, H), lambda i: (i, 0)),
            pl.BlockSpec((tb, H), lambda i: (i, 0)),
        ),
        compiler_params=pltpu.CompilerParams(
            # Batch tiles are independent -> megacore sharding on v7x.
            dimension_semantics=("parallel",),
            # Explicit VMEM budget with headroom for v7x's 64 MiB physical VMEM.
            vmem_limit_bytes=48 * 1024 * 1024,
        ),
        cost_estimate=cost,
    )(temp, code_emb, query_emb, pooler_w, pooler_b)


if __name__ == "__main__":
    # Small, TPU-friendly shapes (B chosen so the batch grid has >1 step).
    B, S, H, V = 16, 8, 128, 100
    TB = 8

    key = jax.random.PRNGKey(0)
    k_emb, k_w, k_b, k_code, k_query = jax.random.split(key, 5)

    # Deterministic synthetic parameters (no checkpoint loading).
    embedding_table = jax.random.normal(k_emb, (V, H), dtype=jnp.float32) * 0.02
    pooler_w = jax.random.normal(k_w, (H, H), dtype=jnp.float32) * 0.02
    pooler_b = jax.random.normal(k_b, (1, H), dtype=jnp.float32) * 0.02
    temp = jnp.zeros((1,), dtype=jnp.float32)   # nn.Parameter(torch.tensor(0.0))

    # Synthetic token ids for the "code_inputs" / "query_inputs" batches.
    code_ids = jax.random.randint(k_code, (B, S), 0, V)
    query_ids = jax.random.randint(k_query, (B, S), 0, V)

    # Glue: embedding lookup (gather) stays in plain JAX.
    code_emb = embedding_table[code_ids]     # (B, S, H)
    query_emb = embedding_table[query_ids]   # (B, S, H)

    q_out, c_out = code_search_forward(temp, code_emb, query_emb,
                                       pooler_w, pooler_b, tb=TB)
    jax.block_until_ready((q_out, c_out))

    # Pure-JAX reference check.
    def ref_encode(emb):
        pooled = jnp.mean(emb, axis=1)
        h = jnp.tanh(pooled @ pooler_w + pooler_b)
        norm = jnp.linalg.norm(h, axis=1, keepdims=True) + SMALL_NUMBER
        return h / norm * jnp.exp(temp[0])

    q_ref = ref_encode(query_emb)
    c_ref = ref_encode(code_emb)
    # Tolerance accounts for the EUP approximate reciprocal (~1e-4 rel error)
    # used for the norm divide; outputs are unit-scale after normalization.
    assert jnp.allclose(q_out, q_ref, atol=1e-3, rtol=1e-3), "query branch mismatch"
    assert jnp.allclose(c_out, c_ref, atol=1e-3, rtol=1e-3), "code branch mismatch"

    print("KERNEL_OK")
</pallas_src>

<mosaic_0001>
module attributes {stable_mosaic.version = 11 : i64} {
  func.func @_finetune_kernel(%arg0: i32, %arg1: memref<1xf32, #tpu.memory_space<smem>>, %arg2: memref<8x8x128xf32, #tpu.memory_space<vmem>>, %arg3: memref<8x8x128xf32, #tpu.memory_space<vmem>>, %arg4: memref<128x128xf32, #tpu.memory_space<vmem>>, %arg5: memref<1x128xf32, #tpu.memory_space<vmem>>, %arg6: memref<8x128xf32, #tpu.memory_space<vmem>>, %arg7: memref<8x128xf32, #tpu.memory_space<vmem>>) attributes {dimension_semantics = [#tpu.dimension_semantics<parallel>], iteration_bounds = array<i64: 2>, scalar_prefetch = 0 : i64, scratch_operands = 0 : i64, tpu.core_type = #tpu.core_type<tc>, window_params = [{transform_indices = @transform_0, window_bounds = array<i64: 1>}, {transform_indices = @transform_1, window_bounds = array<i64: 8, 8, 128>}, {transform_indices = @transform_2, window_bounds = array<i64: 8, 8, 128>}, {pipeline_mode = #tpu.pipeline_mode<synchronous>, transform_indices = @transform_3, window_bounds = array<i64: 128, 128>}, {pipeline_mode = #tpu.pipeline_mode<synchronous>, transform_indices = @transform_4, window_bounds = array<i64: 1, 128>}, {transform_indices = @transform_5, window_bounds = array<i64: 8, 128>}, {transform_indices = @transform_6, window_bounds = array<i64: 8, 128>}]} {
    %c0 = arith.constant 0 : index
    %0 = memref.load %arg1[%c0] : memref<1xf32, #tpu.memory_space<smem>>
    %1 = math.exp %0 : f32
    %c0_0 = arith.constant 0 : index
    %c0_1 = arith.constant 0 : index
    %c0_2 = arith.constant 0 : index
    %2 = vector.load %arg3[%c0_0, %c0_1, %c0_2] : memref<8x8x128xf32, #tpu.memory_space<vmem>>, vector<8x8x128xf32>
    %cst = arith.constant dense<0.000000e+00> : vector<8x128xf32>
    %3 = vector.multi_reduction <add>, %2, %cst [1] : vector<8x8x128xf32> to vector<8x128xf32>
    %cst_3 = arith.constant 1.250000e-01 : f32
    %4 = vector.broadcast %cst_3 : f32 to vector<8x128xf32>
    %5 = arith.mulf %3, %4 : vector<8x128xf32>
    %c0_4 = arith.constant 0 : index
    %c0_5 = arith.constant 0 : index
    %c0_6 = arith.constant 0 : index
    %6 = vector.load %arg2[%c0_4, %c0_5, %c0_6] : memref<8x8x128xf32, #tpu.memory_space<vmem>>, vector<8x8x128xf32>
    %cst_7 = arith.constant dense<0.000000e+00> : vector<8x128xf32>
    %7 = vector.multi_reduction <add>, %6, %cst_7 [1] : vector<8x8x128xf32> to vector<8x128xf32>
    %cst_8 = arith.constant 1.250000e-01 : f32
    %8 = vector.broadcast %cst_8 : f32 to vector<8x128xf32>
    %9 = arith.mulf %7, %8 : vector<8x128xf32>
    %10 = tpu.concatenate %5, %9 in 0 : vector<8x128xf32>, vector<8x128xf32> -> vector<16x128xf32>
    %c0_9 = arith.constant 0 : index
    %c0_10 = arith.constant 0 : index
    %11 = vector.load %arg4[%c0_9, %c0_10] : memref<128x128xf32, #tpu.memory_space<vmem>>, vector<128x128xf32>
    %cst_11 = arith.constant dense<0.000000e+00> : vector<16x128xf32>
    %12 = tpu.matmul %10, %11, %cst_11 {dimension_numbers = #tpu.dot_dimension_numbers<[1], [0], [0], [1], [0, 0, 1, 1], [], []>} : vector<16x128xf32>, vector<128x128xf32>, vector<16x128xf32> -> vector<16x128xf32>
    %c0_12 = arith.constant 0 : index
    %c0_13 = arith.constant 0 : index
    %13 = vector.load %arg5[%c0_12, %c0_13] : memref<1x128xf32, #tpu.memory_space<vmem>>, vector<1x128xf32>
    %14 = vector.broadcast %13 : vector<1x128xf32> to vector<16x128xf32>
    %15 = arith.addf %12, %14 : vector<16x128xf32>
    %16 = math.tanh %15 : vector<16x128xf32>
    %17 = arith.mulf %16, %16 : vector<16x128xf32>
    %cst_14 = arith.constant dense<0.000000e+00> : vector<16xf32>
    %18 = vector.multi_reduction <add>, %17, %cst_14 [1] : vector<16x128xf32> to vector<16xf32>
    %19 = vector.shape_cast %18 : vector<16xf32> to vector<16x1xf32>
    %20 = math.sqrt %19 : vector<16x1xf32>
    %cst_15 = arith.constant 1.000000e-07 : f32
    %21 = vector.broadcast %cst_15 : f32 to vector<16x1xf32>
    %22 = arith.addf %20, %21 : vector<16x1xf32>
    %23 = tpu.reciprocal %22 {approx = true} : vector<16x1xf32> -> vector<16x1xf32>
    %24 = vector.broadcast %1 : f32 to vector<16x1xf32>
    %25 = arith.mulf %23, %24 : vector<16x1xf32>
    %26 = vector.broadcast %25 : vector<16x1xf32> to vector<16x128xf32>
    %27 = arith.mulf %16, %26 : vector<16x128xf32>
    %28 = vector.extract_strided_slice %27 {offsets = [0, 0], sizes = [8, 128], strides = [1, 1]} : vector<16x128xf32> to vector<8x128xf32>
    %c0_16 = arith.constant 0 : index
    %c0_17 = arith.constant 0 : index
    %29 = vector.load %arg6[%c0_16, %c0_17] : memref<8x128xf32, #tpu.memory_space<vmem>>, vector<8x128xf32>
    tpu.vector_store %arg6[%c0_16, %c0_17], %28 {strides = array<i32>} : memref<8x128xf32, #tpu.memory_space<vmem>>, vector<8x128xf32>,
    %30 = vector.extract_strided_slice %27 {offsets = [8, 0], sizes = [8, 128], strides = [1, 1]} : vector<16x128xf32> to vector<8x128xf32>
    %c0_18 = arith.constant 0 : index
    %c0_19 = arith.constant 0 : index
    %31 = vector.load %arg7[%c0_18, %c0_19] : memref<8x128xf32, #tpu.memory_space<vmem>>, vector<8x128xf32>
    tpu.vector_store %arg7[%c0_18, %c0_19], %30 {strides = array<i32>} : memref<8x128xf32, #tpu.memory_space<vmem>>, vector<8x128xf32>,
    return
  }
  func.func @transform_0(%arg0: i32) -> i32 {
    %c0_i32 = arith.constant 0 : i32
    %c0_i32_0 = arith.constant 0 : i32
    return %c0_i32 : i32
  }
  func.func @transform_1(%arg0: i32) -> (i32, i32, i32) {
    %c0_i32 = arith.constant 0 : i32
    %c0_i32_0 = arith.constant 0 : i32
    %c0_i32_1 = arith.constant 0 : i32
    return %arg0, %c0_i32, %c0_i32_0 : i32, i32, i32
  }
  func.func @transform_2(%arg0: i32) -> (i32, i32, i32) {
    %c0_i32 = arith.constant 0 : i32
    %c0_i32_0 = arith.constant 0 : i32
    %c0_i32_1 = arith.constant 0 : i32
    return %arg0, %c0_i32, %c0_i32_0 : i32, i32, i32
  }
  func.func @transform_3(%arg0: i32) -> (i32, i32) {
    %c0_i32 = arith.constant 0 : i32
    %c0_i32_0 = arith.constant 0 : i32
    %c0_i32_1 = arith.constant 0 : i32
    return %c0_i32, %c0_i32_0 : i32, i32
  }
  func.func @transform_4(%arg0: i32) -> (i32, i32) {
    %c0_i32 = arith.constant 0 : i32
    %c0_i32_0 = arith.constant 0 : i32
    %c0_i32_1 = arith.constant 0 : i32
    return %c0_i32, %c0_i32_0 : i32, i32
  }
  func.func @transform_5(%arg0: i32) -> (i32, i32) {
    %c0_i32 = arith.constant 0 : i32
    %c0_i32_0 = arith.constant 0 : i32
    return %arg0, %c0_i32 : i32, i32
  }
  func.func @transform_6(%arg0: i32) -> (i32, i32) {
    %c0_i32 = arith.constant 0 : i32
    %c0_i32_0 = arith.constant 0 : i32
    return %arg0, %c0_i32 : i32, i32
  }
}

</mosaic_0001>

<llo_original>
// kernel: tpu_custom_call.1
$region0: #{tpu_custom_call.1}
  #allocation0 [shape = 'u32[]', space=smem, size = 0x4, offset = 0x4, fixed_abs, tag = 'smem constant byte address 0x4 - core index']
  #allocation1 [shape = 'u32[72,128]{1,0:T(1,128)}', space=vmem, size = 0x9000, scoped, tag = 'internal scratch']
  #allocation2 [shape = 'f32[1]{0:T(128)S(6)}', space=smem, size = 0x200, scoped, tag = 'scoped memory for tpu_custom_call.1']
  %s0 = inlined_call_operand.<no memory space> [shape: f32[1], index: 0, kind: input, shape index: {}]
  %s1 = inlined_call_operand.hbm [shape: f32[16,8,128], index: 1, kind: input, shape index: {}]
  %s2 = inlined_call_operand.hbm [shape: f32[16,8,128], index: 2, kind: input, shape index: {}]
  %s3 = inlined_call_operand.hbm [shape: f32[128,128], index: 3, kind: input, shape index: {}]
  %s4 = inlined_call_operand.vmem [shape: f32[1,128], index: 4, kind: input, shape index: {}]
  %s5 = inlined_call_operand.hbm [shape: f32[16,128], index: 5, kind: output, shape index: {0}]
  %s6 = inlined_call_operand.hbm [shape: f32[16,128], index: 6, kind: output, shape index: {1}]
  %7 = xla_tuple %s5, %s6
  %s8 = sld [smem:[#allocation0]]
  $region73: #{tpu_custom_call.1} parent=0
    _
  %s10 = ssub.s32 1, %s8
  %s11 = scalar_select 0, %s10, %s8
  %12 = sst [smem:[#allocation2]] %s0
  $region1: #{tpu_custom_call.1} parent=0
    #allocation3 [shape = 'u8[65536]{0}', space=vmem, size = 0x10000, scoped, tag = 'input window, operand 1']
    #allocation4 [shape = 's32[2]{0}', space=sflag, size = 0x8, scoped, tag = 'scoped memory for tpu_custom_call.1']
    #allocation5 [shape = 's32[2]{0}', space=sflag, size = 0x8, scoped, tag = 'scoped memory for tpu_custom_call.1']
    #allocation6 [shape = 'u8[65536]{0}', space=vmem, size = 0x10000, scoped, tag = 'input window, operand 2']
    #allocation7 [shape = 's32[2]{0}', space=sflag, size = 0x8, scoped, tag = 'scoped memory for tpu_custom_call.1']
    #allocation8 [shape = 'u8[65536]{0}', space=vmem, size = 0x10000, scoped, tag = 'input window, operand 3, single buffered']
    #allocation9 [shape = 'u8[8192]{0}', space=vmem, size = 0x2000, scoped, tag = 'output window, operand 0']
    #allocation10 [shape = 'u8[8192]{0}', space=vmem, size = 0x2000, scoped, tag = 'output window, operand 1']
    #allocation11 [shape = 's32[2]{0}', space=sflag, size = 0x8, scoped, tag = 'scoped memory for tpu_custom_call.1']
    %13 = vsyncpa [#allocation4], 0
    %s14 = scalar_lea.sflag [#allocation4], 1
    %15 = vsyncpa %s14, 0
    %16 = vsyncpa [#allocation7], 0
    %s17 = scalar_lea.sflag [#allocation7], 1
    %18 = vsyncpa %s17, 0
    %19 = vsyncpa [#allocation5], 0
    %s20 = scalar_lea.sflag [#allocation5], 1
    %21 = vsyncpa %s20, 0
    %22 = vsyncpa [#allocation11], 0
    %s23 = scalar_lea.sflag [#allocation11], 1
    %24 = vsyncpa %s23, 0
    loop: start=0, step=1, limit=4
    $region2: #{tpu_custom_call.1} parent=1 // loop_pre_header
      _
    $region3: #{tpu_custom_call.1} parent=1 // loop_header
      %s26 = sphi 0, %s30
      %p27 = scmp.ge.s32.totalorder %s26, 4
      %s34 = sphi 0, %s34
      %s36 = sphi 0, %s34
      %s37 = sphi 0, %s36
      %s51 = sphi 0, %s37
      %s57 = sphi 0, %s59
      %s60 = sphi 0, %s57
      %s61 = sphi 0, %s60
      %s77 = sphi 0, %s61
      %s83 = sphi 0, %s85
      %s86 = sphi 0, %s83
      %s87 = sphi 0, %s86
      %s103 = sphi 0, %s87
      %s107 = sphi 0, %s107
      %s109 = sphi 0, %s107
      %s110 = sphi 0, %s109
      %s124 = sphi 0, %s110
      %s128 = sphi 0, %s128
      %s130 = sphi 0, %s128
      %s131 = sphi 0, %s130
      %s145 = sphi 0, %s131
      %s151 = sphi 0, %s153
      %s154 = sphi 0, %s151
      %s155 = sphi 0, %s154
      %s171 = sphi 0, %s155
      %s177 = sphi 0, %s179
      %s180 = sphi 0, %s177
      %s181 = sphi 0, %s180
      %s197 = sphi 0, %s181
    $region4: #{tpu_custom_call.1} parent=1 // loop_header_branch
      %29 = sbr.rel (%p27) target = $region8
    $region5: #{tpu_custom_call.1} parent=1 // loop_body
      %s31 = ssub.s32 %s26, 1
      %s32 = ssub.s32 %s26, 2
      %s33 = sadd.s32 %s26, 1
      %s35 = sadd.s32 %s34, 1
      %p38 = scmp.eq.s32.totalorder %s26, 1
      %p39 = scmp.ne.s32.totalorder %s34, %s36
      %p40 = scmp.eq.s32.totalorder %s26, 0
      %p41 = por %p39, %p40
      %p42 = scmp.ne.s32.totalorder %s34, %s36
      %p43 = scmp.eq.s32.totalorder %s31, 1
      %p44 = por %p42, %p43
      %p45 = scmp.ne.s32.totalorder %s36, %s37
      %p46 = scmp.eq.s32.totalorder %s31, 0
      %p47 = por %p45, %p46
      %p48 = scmp.ne.s32.totalorder %s36, %s37
      %p49 = scmp.eq.s32.totalorder %s32, 1
      %p50 = por %p48, %p49
      %p52 = scmp.ne.s32.totalorder %s37, %s51
      %p53 = scmp.eq.s32.totalorder %s32, 0
      %p54 = por %p52, %p53
      %s55 = ssub.s32 %s26, %s33
      %p56 = scmp.eq.s32.totalorder %s55, 0
      %s58 = sadd.s32 %s57, 1
      %s59 = scalar_select %p56, %s57, %s58
      %p62 = pneg %p56
      %p63 = scmp.eq.s32.totalorder %s26, 1
      %p64 = por %p62, %p63
      %p65 = scmp.ne.s32.totalorder %s57, %s60
      %p66 = scmp.eq.s32.totalorder %s26, 0
      %p67 = por %p65, %p66
      %p68 = scmp.ne.s32.totalorder %s57, %s60
      %p69 = scmp.eq.s32.totalorder %s31, 1
      %p70 = por %p68, %p69
      %p71 = scmp.ne.s32.totalorder %s60, %s61
      %p72 = scmp.eq.s32.totalorder %s31, 0
      %p73 = por %p71, %p72
      %p74 = scmp.ne.s32.totalorder %s60, %s61
      %p75 = scmp.eq.s32.totalorder %s32, 1
      %p76 = por %p74, %p75
      %p78 = scmp.ne.s32.totalorder %s61, %s77
      %p79 = scmp.eq.s32.totalorder %s32, 0
      %p80 = por %p78, %p79
      %s81 = ssub.s32 %s26, %s33
      %p82 = scmp.eq.s32.totalorder %s81, 0
      %s84 = sadd.s32 %s83, 1
      %s85 = scalar_select %p82, %s83, %s84
      %p88 = pneg %p82
      %p89 = scmp.eq.s32.totalorder %s26, 1
      %p90 = por %p88, %p89
      %p91 = scmp.ne.s32.totalorder %s83, %s86
      %p92 = scmp.eq.s32.totalorder %s26, 0
      %p93 = por %p91, %p92
      %p94 = scmp.ne.s32.totalorder %s83, %s86
      %p95 = scmp.eq.s32.totalorder %s31, 1
      %p96 = por %p94, %p95
      %p97 = scmp.ne.s32.totalorder %s86, %s87
      %p98 = scmp.eq.s32.totalorder %s31, 0
      %p99 = por %p97, %p98
      %p100 = scmp.ne.s32.totalorder %s86, %s87
      %p101 = scmp.eq.s32.totalorder %s32, 1
      %p102 = por %p100, %p101
      %p104 = scmp.ne.s32.totalorder %s87, %s103
      %p105 = scmp.eq.s32.totalorder %s32, 0
      %p106 = por %p104, %p105
      %s108 = sadd.s32 %s107, 1
      %p111 = scmp.eq.s32.totalorder %s26, 1
      %p112 = scmp.ne.s32.totalorder %s107, %s109
      %p113 = scmp.eq.s32.totalorder %s26, 0
      %p114 = por %p112, %p113
      %p115 = scmp.ne.s32.totalorder %s107, %s109
      %p116 = scmp.eq.s32.totalorder %s31, 1
      %p117 = por %p115, %p116
      %p118 = scmp.ne.s32.totalorder %s109, %s110
      %p119 = scmp.eq.s32.totalorder %s31, 0
      %p120 = por %p118, %p119
      %p121 = scmp.ne.s32.totalorder %s109, %s110
      %p122 = scmp.eq.s32.totalorder %s32, 1
      %p123 = por %p121, %p122
      %p125 = scmp.ne.s32.totalorder %s110, %s124
      %p126 = scmp.eq.s32.totalorder %s32, 0
      %p127 = por %p125, %p126
      %s129 = sadd.s32 %s128, 1
      %p132 = scmp.eq.s32.totalorder %s26, 1
      %p133 = scmp.ne.s32.totalorder %s128, %s130
      %p134 = scmp.eq.s32.totalorder %s26, 0
      %p135 = por %p133, %p134
      %p136 = scmp.ne.s32.totalorder %s128, %s130
      %p137 = scmp.eq.s32.totalorder %s31, 1
      %p138 = por %p136, %p137
      %p139 = scmp.ne.s32.totalorder %s130, %s131
      %p140 = scmp.eq.s32.totalorder %s31, 0
      %p141 = por %p139, %p140
      %p142 = scmp.ne.s32.totalorder %s130, %s131
      %p143 = scmp.eq.s32.totalorder %s32, 1
      %p144 = por %p142, %p143
      %p146 = scmp.ne.s32.totalorder %s131, %s145
      %p147 = scmp.eq.s32.totalorder %s32, 0
      %p148 = por %p146, %p147
      %s149 = ssub.s32 %s26, %s33
      %p150 = scmp.eq.s32.totalorder %s149, 0
      %s152 = sadd.s32 %s151, 1
      %s153 = scalar_select %p150, %s151, %s152
      %p156 = pneg %p150
      %p157 = scmp.eq.s32.totalorder %s26, 1
      %p158 = por %p156, %p157
      %p159 = scmp.ne.s32.totalorder %s151, %s154
      %p160 = scmp.eq.s32.totalorder %s26, 0
      %p161 = por %p159, %p160
      %p162 = scmp.ne.s32.totalorder %s151, %s154
      %p163 = scmp.eq.s32.totalorder %s31, 1
      %p164 = por %p162, %p163
      %p165 = scmp.ne.s32.totalorder %s154, %s155
      %p166 = scmp.eq.s32.totalorder %s31, 0
      %p167 = por %p165, %p166
      %p168 = scmp.ne.s32.totalorder %s154, %s155
      %p169 = scmp.eq.s32.totalorder %s32, 1
      %p170 = por %p168, %p169
      %p172 = scmp.ne.s32.totalorder %s155, %s171
      %p173 = scmp.eq.s32.totalorder %s32, 0
      %p174 = por %p172, %p173
      %s175 = ssub.s32 %s26, %s33
      %p176 = scmp.eq.s32.totalorder %s175, 0
      %s178 = sadd.s32 %s177, 1
      %s179 = scalar_select %p176, %s177, %s178
      %p182 = pneg %p176
      %p183 = scmp.eq.s32.totalorder %s26, 1
      %p184 = por %p182, %p183
      %p185 = scmp.ne.s32.totalorder %s177, %s180
      %p186 = scmp.eq.s32.totalorder %s26, 0
      %p187 = por %p185, %p186
      %p188 = scmp.ne.s32.totalorder %s177, %s180
      %p189 = scmp.eq.s32.totalorder %s31, 1
      %p190 = por %p188, %p189
      %p191 = scmp.ne.s32.totalorder %s180, %s181
      %p192 = scmp.eq.s32.totalorder %s31, 0
      %p193 = por %p191, %p192
      %p194 = scmp.ne.s32.totalorder %s180, %s181
      %p195 = scmp.eq.s32.totalorder %s32, 1
      %p196 = por %p194, %p195
      %p198 = scmp.ne.s32.totalorder %s181, %s197
      %p199 = scmp.eq.s32.totalorder %s32, 0
      %p200 = por %p198, %p199
      %p201 = scmp.le.s32.totalorder 1, %s26
      %p202 = scmp.lt.s32.totalorder %s26, 3
      %p203 = pnand %p201, %p202
      %p204 = pneg %p203
      // Predicated region
      $region9: #{tpu_custom_call.1} parent=5 // pred_check
        _
      $region10: #{tpu_custom_call.1} parent=5 // pred_check_branch
        %206 = sbr.rel (%p203) target = $region12
      $region11: #{tpu_custom_call.1} parent=5 // pred_region
        %s207 = ssub.s32 %s26, 1
        // Predicated region
        $region13: #{tpu_custom_call.1} parent=11 // pred_check
          %p208 = pneg %p47
        $region14: #{tpu_custom_call.1} parent=11 // pred_check_branch
          %210 = sbr.rel (%p208) target = $region16
        $region15: #{tpu_custom_call.1} parent=11 // pred_region
          _
        $region16: #{tpu_custom_call.1} parent=11 // pred_fallthru
          _
        // Predicated region
        $region17: #{tpu_custom_call.1} parent=11 // pred_check
          %p211 = pneg %p120
        $region18: #{tpu_custom_call.1} parent=11 // pred_check_branch
          %213 = sbr.rel (%p211) target = $region20
        $region19: #{tpu_custom_call.1} parent=11 // pred_region
          %215 = vsyncadd [#allocation7], 0
          %s216 = sshll.u32 %s3, 4
          %s217 = int_to_ptr.hbm [resolvable:$true] %s216
          %s218 = sshll.u32 [#allocation8], 4
          %s219 = int_to_ptr.vmem [resolvable:$true] %s218
          %224 = dma.hbm_to_vmem [thread:$0]  %s217, 2048, %s219, [#allocation7], 128, 128, 8
        $region20: #{tpu_custom_call.1} parent=11 // pred_fallthru
          _
        // Predicated region
        $region21: #{tpu_custom_call.1} parent=11 // pred_check
          %p225 = pneg %p141
        $region22: #{tpu_custom_call.1} parent=11 // pred_check_branch
          %227 = sbr.rel (%p225) target = $region24
        $region23: #{tpu_custom_call.1} parent=11 // pred_region
          _
        $region24: #{tpu_custom_call.1} parent=11 // pred_fallthru
          _
      $region12: #{tpu_custom_call.1} parent=5 // pred_fallthru
        _
      %p228 = scmp.lt.s32.totalorder %s26, 2
      // Predicated region
      $region25: #{tpu_custom_call.1} parent=5 // pred_check
        %p229 = pneg %p228
      $region26: #{tpu_custom_call.1} parent=5 // pred_check_branch
        %231 = sbr.rel (%p229) target = $region28
      $region27: #{tpu_custom_call.1} parent=5 // pred_region
        // Predicated region
        $region29: #{tpu_custom_call.1} parent=27 // pred_check
          %p232 = pneg %p67
        $region30: #{tpu_custom_call.1} parent=27 // pred_check_branch
          %234 = sbr.rel (%p232) target = $region32
        $region31: #{tpu_custom_call.1} parent=27 // pred_region
          %s235 = sand.u32 %s57, 1
          %s236 = scalar_lea.sflag [#allocation4], %s235
          %s237 = sand.u32 %s57, 1
          %s238 = smul.addr %s237, 64
          %s239 = scalar_lea.vmem [#allocation3], %s238
          %s240 = smul.u32 8, %s26
          %242 = vsyncadd %s236, 0
          %s243 = smul.addr %s240, 8
          %s244 = scalar_lea.hbm %s1, %s243
          %s245 = sshll.u32 %s244, 4
          %s246 = int_to_ptr.hbm [resolvable:$true] %s245
          %s247 = sshll.u32 %s239, 4
          %s248 = int_to_ptr.vmem [resolvable:$true] %s247
          %253 = dma.hbm_to_vmem [thread:$0]  %s246, 1024, %s248, %s236, 128, 128, 8
        $region32: #{tpu_custom_call.1} parent=27 // pred_fallthru
          _
        // Predicated region
        $region33: #{tpu_custom_call.1} parent=27 // pred_check
          %p254 = pneg %p93
        $region34: #{tpu_custom_call.1} parent=27 // pred_check_branch
          %256 = sbr.rel (%p254) target = $region36
        $region35: #{tpu_custom_call.1} parent=27 // pred_region
          %s257 = sand.u32 %s26, 1
          %s258 = scalar_lea.sflag [#allocation7], %s257
          %s259 = sand.u32 %s83, 1
          %s260 = smul.addr %s259, 64
          %s261 = scalar_lea.vmem [#allocation6], %s260
          %s262 = smul.u32 8, %s26
          %264 = vsyncadd %s258, 0
          %s265 = smul.addr %s262, 8
          %s266 = scalar_lea.hbm %s2, %s265
          %s267 = sshll.u32 %s266, 4
          %s268 = int_to_ptr.hbm [resolvable:$true] %s267
          %s269 = sshll.u32 %s261, 4
          %s270 = int_to_ptr.vmem [resolvable:$true] %s269
          %275 = dma.hbm_to_vmem [thread:$0]  %s268, 1024, %s270, %s258, 128, 128, 8
        $region36: #{tpu_custom_call.1} parent=27 // pred_fallthru
          _
      $region28: #{tpu_custom_call.1} parent=5 // pred_fallthru
        _
      %p276 = scmp.le.s32.totalorder 1, %s26
      %p277 = scmp.lt.s32.totalorder %s26, 3
      %p278 = pnand %p276, %p277
      %p279 = pneg %p278
      // Predicated region
      $region37: #{tpu_custom_call.1} parent=5 // pred_check
        _
      $region38: #{tpu_custom_call.1} parent=5 // pred_check_branch
        %281 = sbr.rel (%p278) target = $region40
      $region39: #{tpu_custom_call.1} parent=5 // pred_region
        %s282 = ssub.s32 %s26, 1
        %s283 = sand.u32 %s60, 1
        %s284 = scalar_lea.sflag [#allocation4], %s283
        %s285 = sand.u32 %s60, 1
        %s286 = smul.addr %s285, 64
        %s287 = scalar_lea.vmem [#allocation3], %s286
        // Predicated region
        $region41: #{tpu_custom_call.1} parent=39 // pred_check
          %p288 = pneg %p73
        $region42: #{tpu_custom_call.1} parent=39 // pred_check_branch
          %290 = sbr.rel (%p288) target = $region44
        $region43: #{tpu_custom_call.1} parent=39 // pred_region
          %292 = dma.done %s284, 1024
        $region44: #{tpu_custom_call.1} parent=39 // pred_fallthru
          _
        %s293 = sand.u32 %s31, 1
        %s294 = scalar_lea.sflag [#allocation7], %s293
        %s295 = sand.u32 %s86, 1
        %s296 = smul.addr %s295, 64
        %s297 = scalar_lea.vmem [#allocation6], %s296
        // Predicated region
        $region45: #{tpu_custom_call.1} parent=39 // pred_check
          %p298 = pneg %p99
        $region46: #{tpu_custom_call.1} parent=39 // pred_check_branch
          %300 = sbr.rel (%p298) target = $region48
        $region47: #{tpu_custom_call.1} parent=39 // pred_region
          %302 = dma.done %s294, 1024
        $region48: #{tpu_custom_call.1} parent=39 // pred_fallthru
          _
        // Predicated region
        $region49: #{tpu_custom_call.1} parent=39 // pred_check
          %p303 = pneg %p120
        $region50: #{tpu_custom_call.1} parent=39 // pred_check_branch
          %305 = sbr.rel (%p303) target = $region52
        $region51: #{tpu_custom_call.1} parent=39 // pred_region
          %307 = dma.done [#allocation7], 2048
        $region52: #{tpu_custom_call.1} parent=39 // pred_fallthru
          _
        %p308 = pneg %p47
        %p309 = pneg %p44
        %s310 = sand.u32 %s60, 1
        %s311 = scalar_lea.sflag [#allocation4], %s310
        %s312 = sand.u32 %s60, 1
        %s313 = smul.addr %s312, 64
        %s314 = scalar_lea.vmem [#allocation3], %s313
        %p315 = pneg %p73
        %p316 = pneg %p70
        %s317 = sand.u32 %s31, 1
        %s318 = scalar_lea.sflag [#allocation7], %s317
        %s319 = sand.u32 %s86, 1
        %s320 = smul.addr %s319, 64
        %s321 = scalar_lea.vmem [#allocation6], %s320
        %p322 = pneg %p99
        %p323 = pneg %p96
        %p324 = pneg %p120
        %p325 = pneg %p117
        %p326 = pneg %p141
        %p327 = pneg %p138
        %p328 = pneg %p167
        %p329 = pneg %p164
        %s330 = sand.u32 %s154, 1
        %s331 = scalar_lea.sflag [#allocation5], %s330
        %s332 = sand.u32 %s154, 1
        %s333 = smul.addr %s332, 8
        %s334 = scalar_lea.vmem [#allocation9], %s333
        %p335 = pneg %p193
        %p336 = pneg %p190
        %s337 = sand.u32 %s180, 1
        %s338 = scalar_lea.sflag [#allocation11], %s337
        %s339 = sand.u32 %s180, 1
        %s340 = smul.addr %s339, 8
        %s341 = scalar_lea.vmem [#allocation10], %s340
        %s342 = smul.u32 8, %s31
        %s343 = smul.u32 8, %s31
        %s344 = sld [smem:[#allocation2]]
        %v345 = vstv %s344
        %v346 = vmul.f32 %v345, 1.442695
        %v347 = vpow.pop %v346
        %s348 = vtos %v347
        %v349 = vld [vmem:[%s297] sm:$0xff]
        %v350 = vld [vmem:[%s297 + $0x8] sm:$0xff]
        %v351 = vld [vmem:[%s297 + $0x10] sm:$0xff]
        %v352 = vld [vmem:[%s297 + $0x18] sm:$0xff]
        %v353 = vld [vmem:[%s297 + $0x20] sm:$0xff]
        %v354 = vld [vmem:[%s297 + $0x28] sm:$0xff]
        %v355 = vld [vmem:[%s297 + $0x30] sm:$0xff]
        %v356 = vld [vmem:[%s297 + $0x38] sm:$0xff]
        %v357 = vrot.slane %v349, 4
        %v358 = vadd.f32 %v349, %v357
        %v359 = vrot.slane %v358, 2
        %v360 = vadd.f32 %v358, %v359
        %v361 = vrot.slane %v360, 1
        %v362 = vadd.f32 %v360, %v361
        %v363 = vrot.slane %v350, 4
        %v364 = vadd.f32 %v350, %v363
        %v365 = vrot.slane %v364, 2
        %v366 = vadd.f32 %v364, %v365
        %v367 = vrot.slane %v366, 1
        %v368 = vadd.f32 %v366, %v367
        %v369 = vrot.slane %v351, 4
        %v370 = vadd.f32 %v351, %v369
        %v371 = vrot.slane %v370, 2
        %v372 = vadd.f32 %v370, %v371
        %v373 = vrot.slane %v372, 1
        %v374 = vadd.f32 %v372, %v373
        %v375 = vrot.slane %v352, 4
        %v376 = vadd.f32 %v352, %v375
        %v377 = vrot.slane %v376, 2
        %v378 = vadd.f32 %v376, %v377
        %v379 = vrot.slane %v378, 1
        %v380 = vadd.f32 %v378, %v379
        %v381 = vrot.slane %v353, 4
        %v382 = vadd.f32 %v353, %v381
        %v383 = vrot.slane %v382, 2
        %v384 = vadd.f32 %v382, %v383
        %v385 = vrot.slane %v384, 1
        %v386 = vadd.f32 %v384, %v385
        %v387 = vrot.slane %v354, 4
        %v388 = vadd.f32 %v354, %v387
        %v389 = vrot.slane %v388, 2
        %v390 = vadd.f32 %v388, %v389
        %v391 = vrot.slane %v390, 1
        %v392 = vadd.f32 %v390, %v391
        %v393 = vrot.slane %v355, 4
        %v394 = vadd.f32 %v355, %v393
        %v395 = vrot.slane %v394, 2
        %v396 = vadd.f32 %v394, %v395
        %v397 = vrot.slane %v396, 1
        %v398 = vadd.f32 %v396, %v397
        %v399 = vrot.slane %v356, 4
        %v400 = vadd.f32 %v356, %v399
        %v401 = vrot.slane %v400, 2
        %v402 = vadd.f32 %v400, %v401
        %v403 = vrot.slane %v402, 1
        %v404 = vadd.f32 %v402, %v403
        %v405 = vmul.f32 %v362, 0.125
        %v406 = vmul.f32 %v368, 0.125
        %v407 = vmul.f32 %v374, 0.125
        %v408 = vmul.f32 %v380, 0.125
        %v409 = vmul.f32 %v386, 0.125
        %v410 = vmul.f32 %v392, 0.125
        %v411 = vmul.f32 %v398, 0.125
        %v412 = vmul.f32 %v404, 0.125
        %v413 = vld [vmem:[%s287] sm:$0xff]
        %v414 = vld [vmem:[%s287 + $0x8] sm:$0xff]
        %v415 = vld [vmem:[%s287 + $0x10] sm:$0xff]
        %v416 = vld [vmem:[%s287 + $0x18] sm:$0xff]
        %v417 = vld [vmem:[%s287 + $0x20] sm:$0xff]
        %v418 = vld [vmem:[%s287 + $0x28] sm:$0xff]
        %v419 = vld [vmem:[%s287 + $0x30] sm:$0xff]
        %v420 = vld [vmem:[%s287 + $0x38] sm:$0xff]
        %v421 = vrot.slane %v413, 4
        %v422 = vadd.f32 %v413, %v421
        %v423 = vrot.slane %v422, 2
        %v424 = vadd.f32 %v422, %v423
        %v425 = vrot.slane %v424, 1
        %v426 = vadd.f32 %v424, %v425
        %v427 = vrot.slane %v414, 4
        %v428 = vadd.f32 %v414, %v427
        %v429 = vrot.slane %v428, 2
        %v430 = vadd.f32 %v428, %v429
        %v431 = vrot.slane %v430, 1
        %v432 = vadd.f32 %v430, %v431
        %v433 = vrot.slane %v415, 4
        %v434 = vadd.f32 %v415, %v433
        %v435 = vrot.slane %v434, 2
        %v436 = vadd.f32 %v434, %v435
        %v437 = vrot.slane %v436, 1
        %v438 = vadd.f32 %v436, %v437
        %v439 = vrot.slane %v416, 4
        %v440 = vadd.f32 %v416, %v439
        %v441 = vrot.slane %v440, 2
        %v442 = vadd.f32 %v440, %v441
        %v443 = vrot.slane %v442, 1
        %v444 = vadd.f32 %v442, %v443
        %v445 = vrot.slane %v417, 4
        %v446 = vadd.f32 %v417, %v445
        %v447 = vrot.slane %v446, 2
        %v448 = vadd.f32 %v446, %v447
        %v449 = vrot.slane %v448, 1
        %v450 = vadd.f32 %v448, %v449
        %v451 = vrot.slane %v418, 4
        %v452 = vadd.f32 %v418, %v451
        %v453 = vrot.slane %v452, 2
        %v454 = vadd.f32 %v452, %v453
        %v455 = vrot.slane %v454, 1
        %v456 = vadd.f32 %v454, %v455
        %v457 = vrot.slane %v419, 4
        %v458 = vadd.f32 %v419, %v457
        %v459 = vrot.slane %v458, 2
        %v460 = vadd.f32 %v458, %v459
        %v461 = vrot.slane %v460, 1
        %v462 = vadd.f32 %v460, %v461
        %v463 = vrot.slane %v420, 4
        %v464 = vadd.f32 %v420, %v463
        %v465 = vrot.slane %v464, 2
        %v466 = vadd.f32 %v464, %v465
        %v467 = vrot.slane %v466, 1
        %v468 = vadd.f32 %v466, %v467
        %v469 = vmul.f32 %v426, 0.125
        %v470 = vmul.f32 %v432, 0.125
        %v471 = vmul.f32 %v438, 0.125
        %v472 = vmul.f32 %v444, 0.125
        %v473 = vmul.f32 %v450, 0.125
        %v474 = vmul.f32 %v456, 0.125
        %v475 = vmul.f32 %v462, 0.125
        %v476 = vmul.f32 %v468, 0.125
        %vm485 = vcmask 1041409
        %v486 = vsel %vm485, %v406, %v405
        %vm487 = vcmask 1042434
        %v488 = vsel %vm487, %v407, %v486
        %vm489 = vcmask 1043459
        %v490 = vsel %vm489, %v408, %v488
        %vm491 = vcmask 1044484
        %v492 = vsel %vm491, %v409, %v490
        %vm493 = vcmask 1045509
        %v494 = vsel %vm493, %v410, %v492
        %vm495 = vcmask 1046534
        %v496 = vsel %vm495, %v411, %v494
        %vm497 = vcmask 1047559
        %v498 = vsel %vm497, %v412, %v496
        %v508 = vsel %vm485, %v470, %v469
        %v509 = vsel %vm487, %v471, %v508
        %v510 = vsel %vm489, %v472, %v509
        %v511 = vsel %vm491, %v473, %v510
        %v512 = vsel %vm493, %v474, %v511
        %v513 = vsel %vm495, %v475, %v512
        %v514 = vsel %vm497, %v476, %v513
        %v516 = vld [vmem:[#allocation8] sm:$0xff]
        %v517 = vld [vmem:[#allocation8 + $0x8] sm:$0xff]
        %v518 = vld [vmem:[#allocation8 + $0x10] sm:$0xff]
        %v519 = vld [vmem:[#allocation8 + $0x18] sm:$0xff]
        %v520 = vld [vmem:[#allocation8 + $0x20] sm:$0xff]
        %v521 = vld [vmem:[#allocation8 + $0x28] sm:$0xff]
        %v522 = vld [vmem:[#allocation8 + $0x30] sm:$0xff]
        %v523 = vld [vmem:[#allocation8 + $0x38] sm:$0xff]
        %v524 = vld [vmem:[#allocation8 + $0x40] sm:$0xff]
        %v525 = vld [vmem:[#allocation8 + $0x48] sm:$0xff]
        %v526 = vld [vmem:[#allocation8 + $0x50] sm:$0xff]
        %v527 = vld [vmem:[#allocation8 + $0x58] sm:$0xff]
        %v528 = vld [vmem:[#allocation8 + $0x60] sm:$0xff]
        %v529 = vld [vmem:[#allocation8 + $0x68] sm:$0xff]
        %v530 = vld [vmem:[#allocation8 + $0x70] sm:$0xff]
        %v531 = vld [vmem:[#allocation8 + $0x78] sm:$0xff]
        %v532 = vld [vmem:[%s4] sm:$0x1]
        %v534 = vperm.slane %v532, 0
        %536 = vmatpush.msra.mxu0 %v531
        %537 = vmatpush.msra.mxu0 %v530
        %538 = vmatpush.msra.mxu0 %v529
        %539 = vmatpush.msra.mxu0 %v528
        %540 = vmatpush.msra.mxu0 %v527
        %541 = vmatpush.msra.mxu0 %v526
        %542 = vmatpush.msra.mxu0 %v525
        %543 = vmatpush.msra.mxu0 %v524
        %544 = vmatpush.msra.mxu0 %v523
        %545 = vmatpush.msra.mxu0 %v522
        %546 = vmatpush.msra.mxu0 %v521
        %547 = vmatpush.msra.mxu0 %v520
        %548 = vmatpush.msra.mxu0 %v519
        %549 = vmatpush.msra.mxu0 %v518
        %550 = vmatpush.msra.mxu0 %v517
        %551 = vmatpush.msra.mxu0 %v516
        %552 = vmatmul.f32.gmra.mxu0 %v498
        %v553 = vpop.f32.mrf.mxu0
        %v554 = vadd.f32 %v534, %v553
        %555 = vmatmul.f32.gmra.mxu0 %v514
        %v556 = vpop.f32.mrf.mxu0
        %v557 = vadd.f32 %v534, %v556
        %558 = vdwg.mxu0
        %v559 = vtanh.pop %v554
        %v560 = vtanh.pop %v557
        %v561 = vmul.f32 %v559, %v559
        %v562 = vmul.f32 %v560, %v560
        %563 = vadd.xlane.f32.xlu0 %v561
        %v564 = vpop.xlane.xlu0 %563
        %565 = vadd.xlane.f32.xlu0 %v562
        %v566 = vpop.xlane.xlu0 %565
        %v567 = vrsqrt.pop %v564
        %v568 = vmul.f32 %v567, %v564
        %v569 = vmul.f32 %v568, %v567
        %v570 = vmul.f32 0.5, %v569
        %v571 = vsub.f32 1.5, %v570
        %v572 = vmul.f32 %v567, %v571
        %v573 = vmul.f32 %v564, %v572
        %vm574 = vcmp.eq.f32.partialorder %v564, inf
        %v575 = vsel %vm574, %v564, %v573
        %vm576 = vcmp.eq.f32.partialorder %v564, 0.0
        %v577 = vand.u32 %v564, 2147483648
        %v578 = vsel %vm576, %v577, %v575
        %v579 = vrsqrt.pop %v566
        %v580 = vmul.f32 %v579, %v566
        %v581 = vmul.f32 %v580, %v579
        %v582 = vmul.f32 0.5, %v581
        %v583 = vsub.f32 1.5, %v582
        %v584 = vmul.f32 %v579, %v583
        %v585 = vmul.f32 %v566, %v584
        %vm586 = vcmp.eq.f32.partialorder %v566, inf
        %v587 = vsel %vm586, %v566, %v585
        %vm588 = vcmp.eq.f32.partialorder %v566, 0.0
        %v589 = vand.u32 %v566, 2147483648
        %v590 = vsel %vm588, %v589, %v587
        %v591 = vadd.f32 %v578, 1e-07
        %v592 = vadd.f32 %v590, 1e-07
        %v593 = vrcp.pop %v591
        %v594 = vrcp.pop %v592
        %v595 = vstv %s348
        %v596 = vmul.f32 %v593, %v595
        %v597 = vmul.f32 %v594, %v595
        %v598 = vmul.f32 %v559, %v596
        %v599 = vmul.f32 %v560, %v597
        %600 = vst [vmem:[%s334] sm:$0xff] %v598
        %601 = vst [vmem:[%s341] sm:$0xff] %v599
        %s602 = sand.u32 %s154, 1
        %s603 = scalar_lea.sflag [#allocation5], %s602
        %s604 = sand.u32 %s154, 1
        %s605 = smul.addr %s604, 8
        %s606 = scalar_lea.vmem [#allocation9], %s605
        %s607 = sand.u32 %s180, 1
        %s608 = scalar_lea.sflag [#allocation11], %s607
        %s609 = sand.u32 %s180, 1
        %s610 = smul.addr %s609, 8
        %s611 = scalar_lea.vmem [#allocation10], %s610
        // Predicated region
        $region53: #{tpu_custom_call.1} parent=39 // pred_check
          %p612 = pneg %p164
        $region54: #{tpu_custom_call.1} parent=39 // pred_check_branch
          %614 = sbr.rel (%p612) target = $region56
        $region55: #{tpu_custom_call.1} parent=39 // pred_region
          %616 = vsyncadd %s603, 0
          %s617 = smul.addr %s31, 8
          %s618 = scalar_lea.hbm %s5, %s617
          %s620 = sshll.u32 %s606, 4
          %s621 = int_to_ptr.vmem [resolvable:$true] %s620
          %s622 = sshll.u32 %s618, 4
          %s623 = int_to_ptr.hbm [resolvable:$true] %s622
          %625 = dma.vmem_to_hbm [thread:$0]  %s621, 128, %s623, %s603
        $region56: #{tpu_custom_call.1} parent=39 // pred_fallthru
          _
        // Predicated region
        $region57: #{tpu_custom_call.1} parent=39 // pred_check
          %p626 = pneg %p190
        $region58: #{tpu_custom_call.1} parent=39 // pred_check_branch
          %628 = sbr.rel (%p626) target = $region60
        $region59: #{tpu_custom_call.1} parent=39 // pred_region
          %630 = vsyncadd %s608, 0
          %s631 = smul.addr %s31, 8
          %s632 = scalar_lea.hbm %s6, %s631
          %s634 = sshll.u32 %s611, 4
          %s635 = int_to_ptr.vmem [resolvable:$true] %s634
          %s636 = sshll.u32 %s632, 4
          %s637 = int_to_ptr.hbm [resolvable:$true] %s636
          %639 = dma.vmem_to_hbm [thread:$0]  %s635, 128, %s637, %s608
        $region60: #{tpu_custom_call.1} parent=39 // pred_fallthru
          _
      $region40: #{tpu_custom_call.1} parent=5 // pred_fallthru
        _
      %p640 = scmp.le.s32.totalorder 2, %s26
      // Predicated region
      $region61: #{tpu_custom_call.1} parent=5 // pred_check
        %p641 = pneg %p640
      $region62: #{tpu_custom_call.1} parent=5 // pred_check_branch
        %643 = sbr.rel (%p641) target = $region64
      $region63: #{tpu_custom_call.1} parent=5 // pred_region
        %s644 = ssub.s32 %s26, 2
        // Predicated region
        $region65: #{tpu_custom_call.1} parent=63 // pred_check
          %p645 = pneg %p170
        $region66: #{tpu_custom_call.1} parent=63 // pred_check_branch
          %647 = sbr.rel (%p645) target = $region68
        $region67: #{tpu_custom_call.1} parent=63 // pred_region
          %s648 = sand.u32 %s155, 1
          %s649 = scalar_lea.sflag [#allocation5], %s648
          %s650 = sand.u32 %s155, 1
          %s651 = smul.addr %s650, 8
          %s652 = scalar_lea.vmem [#allocation9], %s651
          %654 = dma.done %s649, 128
        $region68: #{tpu_custom_call.1} parent=63 // pred_fallthru
          _
        // Predicated region
        $region69: #{tpu_custom_call.1} parent=63 // pred_check
          %p655 = pneg %p196
        $region70: #{tpu_custom_call.1} parent=63 // pred_check_branch
          %657 = sbr.rel (%p655) target = $region72
        $region71: #{tpu_custom_call.1} parent=63 // pred_region
          %s658 = sand.u32 %s181, 1
          %s659 = scalar_lea.sflag [#allocation11], %s658
          %s660 = sand.u32 %s181, 1
          %s661 = smul.addr %s660, 8
          %s662 = scalar_lea.vmem [#allocation10], %s661
          %664 = dma.done %s659, 128
        $region72: #{tpu_custom_call.1} parent=63 // pred_fallthru
          _
      $region64: #{tpu_custom_call.1} parent=5 // pred_fallthru
        _
    $region6: #{tpu_custom_call.1} parent=1 // loop_footer
      %s30 = sadd.s32 1, %s26
    $region7: #{tpu_custom_call.1} parent=1 // loop_footer_branch
      %25 = sbr.rel target = $region3
    $region8: #{tpu_custom_call.1} parent=1 // loop_exit
      _
    %665 = vsyncpa [#allocation4], 1
    %s666 = scalar_lea.sflag [#allocation4], 1
    %667 = vsyncpa %s666, 1
    %668 = vsyncpa [#allocation7], 1
    %s669 = scalar_lea.sflag [#allocation7], 1
    %670 = vsyncpa %s669, 1
    %671 = vsyncpa [#allocation5], 1
    %s672 = scalar_lea.sflag [#allocation5], 1
    %673 = vsyncpa %s672, 1
    %674 = vsyncpa [#allocation11], 1
    %s675 = scalar_lea.sflag [#allocation11], 1
    %676 = vsyncpa %s675, 1

</llo_original>
